<compile_context>
chip_gen: v6e
topology: v6e:2x2x1
jax: 0.10.0
libtpu: 0.0.40
codegen_flags: <defaults>
</compile_context>

<pallas_src>
import functools

import jax
import jax.numpy as jnp
from jax import lax
from jax.experimental import pallas as pl
from jax.experimental.pallas import tpu as pltpu


# ---------------------------------------------------------------------------
# Hardware-derived tiling / VMEM budget
# ---------------------------------------------------------------------------

def _tpu_vmem_bytes():
    """Physical per-core VMEM bytes; conservative v7x default if query fails."""
    try:
        info = pltpu.get_tpu_info()
        cap = getattr(info, "vmem_capacity_bytes", None)
        if cap:
            return int(cap)
    except Exception:
        pass
    return 64 * 1024 * 1024


_VMEM_BYTES = _tpu_vmem_bytes()
# Leave headroom for Mosaic's internal scratch; never request more than 96 MiB.
_VMEM_LIMIT = int(min((_VMEM_BYTES * 3) // 4, 96 * 1024 * 1024))
# 128-MiB parts (v5e/v6e) take bigger blocks toward the HBM roofline; the
# 64-MiB part (v7x) stays at 512.
_TILE_CAP = 1024 if _VMEM_BYTES >= 96 * 1024 * 1024 else 512


def _pick_tile(dim, cap, aligns):
    """Largest divisor of `dim` that is <= cap and a multiple of one of
    `aligns` (tried in order).  Falls back to the full dim, which is always a
    legal block shape.

    NOTE: the full-dim fallback can exceed the intended VMEM budget for
    awkward (prime-ish) dims; realistic swin dims are 128/256-aligned and the
    toy test dims are tiny, so this never triggers here.
    """
    if dim <= cap:
        return dim
    for align in aligns:
        t = (cap // align) * align
        while t >= align:
            if dim % t == 0:
                return t
            t -= align
    return dim


# ---------------------------------------------------------------------------
# Pallas kernels
# ---------------------------------------------------------------------------

def _linear_scratch_kernel(x_ref, w_ref, b_ref, o_ref, acc_ref):
    """One (tm, tn) tile of o = x @ w + b via an f32 scratch (bf16 outputs)."""
    k = pl.program_id(2)

    @pl.when(k == 0)
    def _():
        acc_ref[...] = jnp.zeros_like(acc_ref)

    # bf16 MXU operands (w is pre-cast bf16; the activation cast is a no-op
    # when x is already bf16); f32 accumulation.
    acc_ref[...] += jnp.dot(x_ref[...].astype(jnp.bfloat16),
                            w_ref[...].astype(jnp.bfloat16),
                            preferred_element_type=jnp.float32)

    @pl.when(k == pl.num_programs(2) - 1)
    def _():
        o_ref[...] = (acc_ref[...] + b_ref[...]).astype(o_ref.dtype)


def _linear_accout_kernel(x_ref, w_ref, b_ref, o_ref):
    """One (tm, tn) tile of o = x @ w + b accumulating directly into the
    resident f32 output block (no scratch, no final full-tile copy)."""
    k = pl.program_id(2)

    @pl.when(k == 0)
    def _():
        o_ref[...] = jnp.zeros_like(o_ref)

    o_ref[...] += jnp.dot(x_ref[...].astype(jnp.bfloat16),
                          w_ref[...].astype(jnp.bfloat16),
                          preferred_element_type=jnp.float32)

    @pl.when(k == pl.num_programs(2) - 1)
    def _():
        o_ref[...] += b_ref[...]


def _attention_kernel(qkv_ref, o_ref, *, num_heads, head_dim):
    """One batch element of multi-head softmax(q k^T) @ v.

    qkv_ref is the (N, 3C) bf16 qkv-linear block laid out [3, H, D] along the
    last axis (exactly the nn.Linear output — no XLA permute pass); `scale` is
    already folded into the q columns.  Each head runs bf16 MXU matmuls with
    an f32 softmax and is stored straight into its lane range of the (N, C)
    output block, so no per-head result stays live past its store.
    """
    C = num_heads * head_dim
    for h in range(num_heads):             # small static head count -> unrolled
        lo = h * head_dim
        q = qkv_ref[:, lo:lo + head_dim]                    # (N, D) bf16, pre-scaled
        k = qkv_ref[:, C + lo:C + lo + head_dim]            # (N, D) bf16
        v = qkv_ref[:, 2 * C + lo:2 * C + lo + head_dim]    # (N, D) bf16

        # q @ k^T on the MXU without materializing a transposed copy of k.
        s = lax.dot_general(q, k, (((1,), (1,)), ((), ())),
                            preferred_element_type=jnp.float32)      # (N, N) f32
        # Numerically stable softmax, all f32 (v5e has no bf16 VPU/EUP).
        s = s - jnp.max(s, axis=-1, keepdims=True)
        p = jnp.exp(s)
        p = p * pl.reciprocal(jnp.sum(p, axis=-1, keepdims=True), approx=True)
        # Per-head store ends this head's live range (no concat, no spills).
        o_ref[:, lo:lo + head_dim] = jnp.dot(
            p.astype(jnp.bfloat16), v,
            preferred_element_type=jnp.float32).astype(o_ref.dtype)
    # TODO(synk): for large N, add a kv grid axis with an online-softmax
    # (flash) accumulator so the (N, N) scores never materialize; a per-head
    # grid axis is only legal once head_dim >= 128 (per-head lane blocks
    # violate the (8,128) block rule for smaller head_dim).


# ---------------------------------------------------------------------------
# Wrappers around pallas_call
# ---------------------------------------------------------------------------

def pallas_linear(x, w_t, b, *, out_dtype, tile_cap=_TILE_CAP):
    """x: (M, K), w_t: (K, Nout) bf16 (in, out layout), b: (Nout,) f32."""
    M, K = x.shape
    Nout = w_t.shape[1]
    tm = _pick_tile(M, tile_cap, (16, 8))        # sublane dim; 16 for bf16 packing
    tk = _pick_tile(K, tile_cap, (256, 128))     # lane dim of x / sublane of w
    tn = _pick_tile(Nout, tile_cap, (256, 128))  # lane dim of w / b / out
    grid = (M // tm, Nout // tn, K // tk)

    use_scratch = (out_dtype != jnp.float32)
    kernel = _linear_scratch_kernel if use_scratch else _linear_accout_kernel
    scratch = [pltpu.VMEM((tm, tn), jnp.float32)] if use_scratch else []

    return pl.pallas_call(
        kernel,
        out_shape=jax.ShapeDtypeStruct((M, Nout), out_dtype),
        grid_spec=pltpu.PrefetchScalarGridSpec(
            num_scalar_prefetch=0,
            grid=grid,
            in_specs=[
                pl.BlockSpec((tm, tk), lambda i, j, k: (i, k)),
                pl.BlockSpec((tk, tn), lambda i, j, k: (k, j)),
                pl.BlockSpec((1, tn), lambda i, j, k: (0, j)),
            ],
            out_specs=pl.BlockSpec((tm, tn), lambda i, j, k: (i, j)),
            scratch_shapes=scratch,
        ),
        compiler_params=pltpu.CompilerParams(
            # M / N tiles shard across TensorCores; K reduction stays in-order.
            dimension_semantics=("parallel", "parallel", "arbitrary"),
            vmem_limit_bytes=_VMEM_LIMIT,
        ),
    )(x, w_t, b.reshape(1, Nout))


def pallas_attention(qkv, num_heads):
    """qkv: (B, N, 3C) bf16 qkv-linear output -> (B, N, C) bf16."""
    B, N, C3 = qkv.shape
    C = C3 // 3
    D = C // num_heads
    kernel = functools.partial(_attention_kernel, num_heads=num_heads, head_dim=D)
    return pl.pallas_call(
        kernel,
        out_shape=jax.ShapeDtypeStruct((B, N, C), qkv.dtype),
        grid_spec=pltpu.PrefetchScalarGridSpec(
            num_scalar_prefetch=0,
            grid=(B,),
            # Batch dim squeezed: kernel sees a lane-dense (N, 3C) input block
            # and writes ONE lane-dense (N, C) output block (no transposes).
            in_specs=[pl.BlockSpec((None, N, C3), lambda b: (b, 0, 0))],
            out_specs=pl.BlockSpec((None, N, C), lambda b: (b, 0, 0)),
        ),
        compiler_params=pltpu.CompilerParams(
            dimension_semantics=("parallel",),
            vmem_limit_bytes=_VMEM_LIMIT,
        ),
    )(qkv)


# ---------------------------------------------------------------------------
# Parameters & CrossAttention forward
# ---------------------------------------------------------------------------

def init_cross_attention_params(key, dim, num_heads):
    """Torch-convention parameters (nn.Linear weights are (out, in))."""
    k1, k2, k3, k4 = jax.random.split(key, 4)
    head_dim = dim // num_heads
    return {
        "qkv_w": jax.random.normal(k1, (3 * dim, dim), jnp.float32) * 0.02,
        "qkv_b": jax.random.normal(k2, (3 * dim,), jnp.float32) * 0.02,
        "proj_w": jax.random.normal(k3, (dim, dim), jnp.float32) * 0.02,
        "proj_b": jax.random.normal(k4, (dim,), jnp.float32) * 0.02,
        "scale": jnp.ones((1,), jnp.float32) * (head_dim ** -0.5),
    }


def prepare_inference_params(params):
    """One-time host-side prep: pre-transpose weights to (in, out), fold
    `scale` into the q rows of qkv_w / qkv_b (q = x@Wq + bq, so scaling W/b is
    mathematically identical to `q @ k^T * scale`), and pre-cast the MXU
    weight operands to bf16.  Biases stay f32 (added to the f32 accumulator).
    """
    dim = params["proj_w"].shape[0]
    scale = params["scale"][0]
    out_scale = jnp.concatenate([jnp.full((dim,), scale, jnp.float32),
                                 jnp.ones((2 * dim,), jnp.float32)])
    qkv_w = params["qkv_w"] * out_scale[:, None]          # (3C, C) torch layout
    qkv_b = params["qkv_b"] * out_scale
    return {
        "qkv_w_t": qkv_w.T.astype(jnp.bfloat16),           # (C, 3C)
        "qkv_b": qkv_b.astype(jnp.float32),
        "proj_w_t": params["proj_w"].T.astype(jnp.bfloat16),  # (C, C)
        "proj_b": params["proj_b"].astype(jnp.float32),
    }


def cross_attention_forward(prepared, query, key, value, num_heads):
    """Mirrors CrossAttention.forward (key/value args are unused, as in torch).
    attn_drop / proj_drop are identity in eval mode (no RNG here)."""
    del key, value  # the PyTorch forward ignores them
    B, N, C = query.shape

    # qkv = self.qkv(query): bf16 intermediate halves HBM between kernels.
    qkv = pallas_linear(query.reshape(B * N, C), prepared["qkv_w_t"],
                        prepared["qkv_b"], out_dtype=jnp.bfloat16)
    qkv = qkv.reshape(B, N, 3 * C)      # free reshape; last-axis layout [3, H, D]

    # Multi-head attention straight off the qkv slab (no permute/transpose).
    attn_out = pallas_attention(qkv, num_heads)            # (B, N, C) bf16

    # x = self.proj(x): f32 output, accumulated directly in the output block.
    out = pallas_linear(attn_out.reshape(B * N, C), prepared["proj_w_t"],
                        prepared["proj_b"], out_dtype=jnp.float32)
    return out.reshape(B, N, C)


# ---------------------------------------------------------------------------
# Reference (plain JAX, f32) for a sanity check
# ---------------------------------------------------------------------------

def cross_attention_reference(params, query, num_heads):
    B, N, C = query.shape
    H = num_heads
    D = C // H
    qkv = query @ params["qkv_w"].T + params["qkv_b"]
    qkv = qkv.reshape(B, N, 3, H, D).transpose(2, 0, 3, 1, 4)
    q, k, v = qkv[0], qkv[1], qkv[2]
    attn = jnp.einsum("bhnd,bhmd->bhnm", q, k) * params["scale"][0]
    attn = jax.nn.softmax(attn, axis=-1)
    x = jnp.einsum("bhnm,bhmd->bhnd", attn, v)
    x = x.transpose(0, 2, 1, 3).reshape(B, N, C)
    return x @ params["proj_w"].T + params["proj_b"]


if __name__ == "__main__":
    B, N, C, H = 2, 16, 32, 4

    root = jax.random.PRNGKey(0)
    kp, kq, kk, kv = jax.random.split(root, 4)

    params = init_cross_attention_params(kp, C, H)
    prepared = prepare_inference_params(params)           # one-time host prep
    query = jax.random.normal(kq, (B, N, C), jnp.float32)
    key_in = jax.random.normal(kk, (B, N, C), jnp.float32)    # unused by forward
    value_in = jax.random.normal(kv, (B, N, C), jnp.float32)  # unused by forward

    out = cross_attention_forward(prepared, query, key_in, value_in, H)
    out = jax.block_until_ready(out)
    assert out.shape == (B, N, C)
    assert out.dtype == jnp.float32

    ref = cross_attention_reference(params, query, H)
    # bf16 MXU operands + bf16 qkv / attention intermediates (intentional, per
    # the perf review) + approx reciprocal -> compare at bf16-level tolerance.
    err = float(jnp.max(jnp.abs(out - ref)))
    tol = 2e-2 * float(jnp.max(jnp.abs(ref))) + 2e-4
    assert err <= tol, f"mismatch vs reference: max_abs_err={err}, tol={tol}"

    print("KERNEL_OK")
</pallas_src>

<mosaic_0001>
module attributes {stable_mosaic.version = 11 : i64} {
  func.func @_linear_scratch_kernel(%arg0: i32, %arg1: i32, %arg2: i32, %arg3: memref<32x32xf32, #tpu.memory_space<vmem>>, %arg4: memref<32x96xbf16, #tpu.memory_space<vmem>>, %arg5: memref<1x96xf32, #tpu.memory_space<vmem>>, %arg6: memref<32x96xbf16, #tpu.memory_space<vmem>>, %arg7: memref<32x96xf32, #tpu.memory_space<vmem>>) attributes {dimension_semantics = [#tpu.dimension_semantics<parallel>, #tpu.dimension_semantics<parallel>, #tpu.dimension_semantics<arbitrary>], iteration_bounds = array<i64: 1, 1, 1>, scalar_prefetch = 0 : i64, scratch_operands = 1 : i64, tpu.core_type = #tpu.core_type<tc>, window_params = [{transform_indices = @transform_0, window_bounds = array<i64: 32, 32>}, {transform_indices = @transform_1, window_bounds = array<i64: 32, 96>}, {transform_indices = @transform_2, window_bounds = array<i64: 1, 96>}, {transform_indices = @transform_3, window_bounds = array<i64: 32, 96>}]} {
    %c0_i32 = arith.constant 0 : i32
    %0 = arith.cmpi eq, %arg2, %c0_i32 : i32
    %1 = arith.extui %0 : i1 to i32
    %c0_i32_0 = arith.constant 0 : i32
    %2 = arith.cmpi ne, %1, %c0_i32_0 : i32
    scf.if %2 {
      %cst_10 = arith.constant 0.000000e+00 : f32
      %13 = vector.broadcast %cst_10 : f32 to vector<32x96xf32>
      %c0_11 = arith.constant 0 : index
      %c0_12 = arith.constant 0 : index
      %14 = vector.load %arg7[%c0_11, %c0_12] : memref<32x96xf32, #tpu.memory_space<vmem>>, vector<32x96xf32>
      tpu.vector_store %arg7[%c0_11, %c0_12], %13 {strides = array<i32>} : memref<32x96xf32, #tpu.memory_space<vmem>>, vector<32x96xf32>,
    } else {
    }
    %c0 = arith.constant 0 : index
    %c0_1 = arith.constant 0 : index
    %3 = vector.load %arg7[%c0, %c0_1] : memref<32x96xf32, #tpu.memory_space<vmem>>, vector<32x96xf32>
    %c0_2 = arith.constant 0 : index
    %c0_3 = arith.constant 0 : index
    %4 = vector.load %arg3[%c0_2, %c0_3] : memref<32x32xf32, #tpu.memory_space<vmem>>, vector<32x32xf32>
    %5 = arith.truncf %4 : vector<32x32xf32> to vector<32x32xbf16>
    %c0_4 = arith.constant 0 : index
    %c0_5 = arith.constant 0 : index
    %6 = vector.load %arg4[%c0_4, %c0_5] : memref<32x96xbf16, #tpu.memory_space<vmem>>, vector<32x96xbf16>
    %cst = arith.constant dense<0.000000e+00> : vector<32x96xf32>
    %7 = tpu.matmul %5, %6, %cst {dimension_numbers = #tpu.dot_dimension_numbers<[1], [0], [0], [1], [0, 0, 1, 1], [], []>} : vector<32x32xbf16>, vector<32x96xbf16>, vector<32x96xf32> -> vector<32x96xf32>
    %8 = arith.addf %3, %7 : vector<32x96xf32>
    %c0_6 = arith.constant 0 : index
    %c0_7 = arith.constant 0 : index
    %9 = vector.load %arg7[%c0_6, %c0_7] : memref<32x96xf32, #tpu.memory_space<vmem>>, vector<32x96xf32>
    tpu.vector_store %arg7[%c0_6, %c0_7], %8 {strides = array<i32>} : memref<32x96xf32, #tpu.memory_space<vmem>>, vector<32x96xf32>,
    %c0_i32_8 = arith.constant 0 : i32
    %10 = arith.cmpi eq, %arg2, %c0_i32_8 : i32
    %11 = arith.extui %10 : i1 to i32
    %c0_i32_9 = arith.constant 0 : i32
    %12 = arith.cmpi ne, %11, %c0_i32_9 : i32
    scf.if %12 {
      %c0_10 = arith.constant 0 : index
      %c0_11 = arith.constant 0 : index
      %13 = vector.load %arg7[%c0_10, %c0_11] : memref<32x96xf32, #tpu.memory_space<vmem>>, vector<32x96xf32>
      %c0_12 = arith.constant 0 : index
      %c0_13 = arith.constant 0 : index
      %14 = vector.load %arg5[%c0_12, %c0_13] : memref<1x96xf32, #tpu.memory_space<vmem>>, vector<1x96xf32>
      %15 = vector.broadcast %14 : vector<1x96xf32> to vector<32x96xf32>
      %16 = arith.addf %13, %15 : vector<32x96xf32>
      %17 = arith.truncf %16 : vector<32x96xf32> to vector<32x96xbf16>
      %c0_14 = arith.constant 0 : index
      %c0_15 = arith.constant 0 : index
      %18 = vector.load %arg6[%c0_14, %c0_15] : memref<32x96xbf16, #tpu.memory_space<vmem>>, vector<32x96xbf16>
      tpu.vector_store %arg6[%c0_14, %c0_15], %17 {strides = array<i32>} : memref<32x96xbf16, #tpu.memory_space<vmem>>, vector<32x96xbf16>,
    } else {
    }
    return
  }
  func.func @transform_0(%arg0: i32, %arg1: i32, %arg2: i32) -> (i32, i32) {
    %c0_i32 = arith.constant 0 : i32
    return %arg0, %arg2 : i32, i32
  }
  func.func @transform_1(%arg0: i32, %arg1: i32, %arg2: i32) -> (i32, i32) {
    %c0_i32 = arith.constant 0 : i32
    return %arg2, %arg1 : i32, i32
  }
  func.func @transform_2(%arg0: i32, %arg1: i32, %arg2: i32) -> (i32, i32) {
    %c0_i32 = arith.constant 0 : i32
    %c0_i32_0 = arith.constant 0 : i32
    return %c0_i32, %arg1 : i32, i32
  }
  func.func @transform_3(%arg0: i32, %arg1: i32, %arg2: i32) -> (i32, i32) {
    %c0_i32 = arith.constant 0 : i32
    return %arg0, %arg1 : i32, i32
  }
}

</mosaic_0001>

<llo_original>
// kernel: tpu_custom_call.1
$region0: #{tpu_custom_call.1}
  #allocation0 [shape = 'u32[]', space=smem, size = 0x4, offset = 0x4, fixed_abs, tag = 'smem constant byte address 0x4 - core index']
  #allocation1 [shape = 'u32[144,128]{1,0:T(1,128)}', space=vmem, size = 0x12000, scoped, tag = 'internal scratch']
  #allocation2 [shape = 'f32[32,96]{1,0:T(8,128)}', space=vmem, size = 0x4000, scoped, tag = 'scratch operand']
  %s0 = inlined_call_operand.hbm [shape: f32[32,32], index: 0, kind: input, shape index: {}]
  %s1 = inlined_call_operand.hbm [shape: bf16[32,96], index: 1, kind: input, shape index: {}]
  %s2 = inlined_call_operand.vmem [shape: f32[1,96], index: 2, kind: input, shape index: {}]
  %s3 = inlined_call_operand.hbm [shape: bf16[32,96], index: 3, kind: output, shape index: {}]
  %s4 = sld [smem:[#allocation0]]
  $region38: #{tpu_custom_call.1} parent=0
    _
  %s6 = ssub.s32 1, %s4
  %s7 = scalar_select 0, %s6, %s4
  $region1: #{tpu_custom_call.1} parent=0
    #allocation3 [shape = 'u8[16384]{0}', space=vmem, size = 0x4000, scoped, tag = 'input window, operand 0, single buffered']
    #allocation4 [shape = 's32[1]{0}', space=sflag, size = 0x4, scoped, tag = 'scoped memory for tpu_custom_call.1']
    #allocation5 [shape = 's32[1]{0}', space=sflag, size = 0x4, scoped, tag = 'scoped memory for tpu_custom_call.1']
    #allocation6 [shape = 'u8[8192]{0}', space=vmem, size = 0x2000, scoped, tag = 'input window, operand 1, single buffered']
    #allocation7 [shape = 's32[1]{0}', space=sflag, size = 0x4, scoped, tag = 'scoped memory for tpu_custom_call.1']
    #allocation8 [shape = 'u8[8192]{0}', space=vmem, size = 0x2000, scoped, tag = 'output window, operand 0, single buffered']
    %8 = vsyncpa [#allocation4], 0
    %9 = vsyncpa [#allocation7], 0
    %10 = vsyncpa [#allocation5], 0
    // Predicated region
    $region2: #{tpu_custom_call.1} parent=1 // pred_check
      _
    $region3: #{tpu_custom_call.1} parent=1 // pred_check_branch
      %12 = sbr.rel (0) target = $region5
    $region4: #{tpu_custom_call.1} parent=1 // pred_region
      %s14 = ssub.s32 512, 512
      %15 = vsyncadd [#allocation4], %s14
      %s16 = sshll.u32 [#allocation3], 4
      %s17 = int_to_ptr.vmem [resolvable:$true] %s16
      %22 = dma.hbm_to_vmem [thread:$0]  %s0, 512, %s17, [#allocation4], 128, 128, 8
    $region5: #{tpu_custom_call.1} parent=1 // pred_fallthru
      _
    // Predicated region
    $region6: #{tpu_custom_call.1} parent=1 // pred_check
      _
    $region7: #{tpu_custom_call.1} parent=1 // pred_check_branch
      %24 = sbr.rel (0) target = $region9
    $region8: #{tpu_custom_call.1} parent=1 // pred_region
      %s26 = ssub.s32 256, 256
      %27 = vsyncadd [#allocation7], %s26
      %s28 = sshll.u32 [#allocation6], 4
      %s29 = int_to_ptr.vmem [resolvable:$true] %s28
      %34 = dma.hbm_to_vmem [thread:$0]  %s1, 256, %s29, [#allocation7], 64, 64, 4
    $region9: #{tpu_custom_call.1} parent=1 // pred_fallthru
      _
    // Predicated region
    $region10: #{tpu_custom_call.1} parent=1 // pred_check
      _
    $region11: #{tpu_custom_call.1} parent=1 // pred_check_branch
      %36 = sbr.rel (0) target = $region13
    $region12: #{tpu_custom_call.1} parent=1 // pred_region
      _
    $region13: #{tpu_custom_call.1} parent=1 // pred_fallthru
      _
    // Predicated region
    $region14: #{tpu_custom_call.1} parent=1 // pred_check
      _
    $region15: #{tpu_custom_call.1} parent=1 // pred_check_branch
      %38 = sbr.rel (0) target = $region17
    $region16: #{tpu_custom_call.1} parent=1 // pred_region
      %39 = dma.done [#allocation4], 512
    $region17: #{tpu_custom_call.1} parent=1 // pred_fallthru
      _
    // Predicated region
    $region18: #{tpu_custom_call.1} parent=1 // pred_check
      _
    $region19: #{tpu_custom_call.1} parent=1 // pred_check_branch
      %41 = sbr.rel (0) target = $region21
    $region20: #{tpu_custom_call.1} parent=1 // pred_region
      %42 = dma.done [#allocation7], 256
    $region21: #{tpu_custom_call.1} parent=1 // pred_fallthru
      _
    %p44 = scmp.eq.s32.totalorder 0, 0
    // Predicated region
    $region22: #{tpu_custom_call.1} parent=1 // pred_check
      %p45 = pneg %p44
    $region23: #{tpu_custom_call.1} parent=1 // pred_check_branch
      %47 = sbr.rel (%p45) target = $region25
    $region24: #{tpu_custom_call.1} parent=1 // pred_region
      %vm48 = vcmask 785408
      %49 = vst.msk [vmem:[#allocation2] sm:$0xff] %vm48, 0.0
      %50 = vst.msk [vmem:[#allocation2 + $0x8] sm:$0xff] %vm48, 0.0
      %51 = vst.msk [vmem:[#allocation2 + $0x10] sm:$0xff] %vm48, 0.0
      %52 = vst.msk [vmem:[#allocation2 + $0x18] sm:$0xff] %vm48, 0.0
    $region25: #{tpu_custom_call.1} parent=1 // pred_fallthru
      _
    %v53 = vld [vmem:[#allocation2] sm:$0xff]
    %v54 = vld [vmem:[#allocation2 + $0x8] sm:$0xff]
    %v55 = vld [vmem:[#allocation2 + $0x10] sm:$0xff]
    %v56 = vld [vmem:[#allocation2 + $0x18] sm:$0xff]
    %v57 = vld [vmem:[#allocation3] sm:$0xff]
    %v58 = vld [vmem:[#allocation3 + $0x8] sm:$0xff]
    %v59 = vld [vmem:[#allocation3 + $0x10] sm:$0xff]
    %v60 = vld [vmem:[#allocation3 + $0x18] sm:$0xff]
    %v61 = vpack.c.bf16 %v58, %v57
    %v62 = vpack.c.bf16 %v60, %v59
    %v63 = vld [vmem:[#allocation6] sm:$0xf]
    %v64 = vld [vmem:[#allocation6 + $0x4] sm:$0xf]
    %v65 = vld [vmem:[#allocation6 + $0x8] sm:$0xf]
    %v66 = vld [vmem:[#allocation6 + $0xc] sm:$0xf]
    %v71 = vunpack.c.l.b16 %v63
    %v72 = vunpack.c.l.b16 %v64
    %v73 = vunpack.c.l.b16 %v65
    %v74 = vunpack.c.l.b16 %v66
    %v75 = vpack.c.b16 %v72, %v71
    %v76 = vpack.c.b16 %v74, %v73
    %vm79 = vcmask 261120
    %v81 = vsel %vm79, %v61, 0
    %v84 = vsel %vm79, %v62, 0
    %86 = vmatprep.subr.bf16.mxu0 0
    %87 = vmatpush1.bf16.msra.mxu0 0
    %88 = vmatprep.subr.bf16.mxu0 0
    %89 = vmatpush1.bf16.msra.mxu0 0
    %90 = vmatprep.subr.bf16.mxu0 0
    %91 = vmatpush1.bf16.msra.mxu0 0
    %92 = vmatprep.subr.bf16.mxu0 0
    %93 = vmatpush1.bf16.msra.mxu0 0
    %94 = vmatprep.subr.bf16.mxu0 0
    %95 = vmatpush1.bf16.msra.mxu0 0
    %96 = vmatprep.subr.bf16.mxu0 0
    %97 = vmatpush1.bf16.msra.mxu0 0
    %98 = vmatprep.subr.bf16.mxu0 0
    %99 = vmatpush1.bf16.msra.mxu0 %v76
    %100 = vmatprep.subr.bf16.mxu0 0
    %101 = vmatpush1.bf16.msra.mxu0 %v75
    %102 = vmatprep.subr.bf16.mxu0 0
    %103 = vmatpush2.bf16.msra.mxu0 0
    %104 = vmatprep.subr.bf16.mxu0 0
    %105 = vmatpush2.bf16.msra.mxu0 0
    %106 = vmatprep.subr.bf16.mxu0 0
    %107 = vmatpush2.bf16.msra.mxu0 0
    %108 = vmatprep.subr.bf16.mxu0 0
    %109 = vmatpush2.bf16.msra.mxu0 0
    %110 = vmatprep.subr.bf16.mxu0 0
    %111 = vmatpush2.bf16.msra.mxu0 0
    %112 = vmatprep.subr.bf16.mxu0 0
    %113 = vmatpush2.bf16.msra.mxu0 0
    %114 = vmatprep.subr.bf16.mxu0 0
    %115 = vmatpush2.bf16.msra.mxu0 0
    %116 = vmatprep.subr.bf16.mxu0 0
    %117 = vmatpush2.bf16.msra.mxu0 0
    %118 = vmatprep.mubr.bf16.mxu0 0
    %119 = vmatmul.mubr.bf16.gmra.mxu0 %v81
    %v120 = vpop.f32.mrf.mxu0
    %v121 = vadd.f32 0.0, %v120
    %v122 = vpop.f32.mrf.mxu0
    %v123 = vpop.f32.mrf.mxu0
    %v124 = vadd.f32 0.0, %v123
    %v125 = vpop.f32.mrf.mxu0
    %126 = vmatprep.mubr.bf16.mxu0 0
    %127 = vmatmul.mubr.bf16.gmra.mxu0 %v84
    %v128 = vpop.f32.mrf.mxu0
    %v129 = vadd.f32 0.0, %v128
    %v130 = vpop.f32.mrf.mxu0
    %v131 = vpop.f32.mrf.mxu0
    %v132 = vadd.f32 0.0, %v131
    %v133 = vpop.f32.mrf.mxu0
    %134 = vdwg.mxu0
    %v135 = vadd.f32 %v53, %v121
    %v136 = vadd.f32 %v54, %v124
    %v137 = vadd.f32 %v55, %v129
    %v138 = vadd.f32 %v56, %v132
    %vm139 = vcmask 785408
    %140 = vst.msk [vmem:[#allocation2] sm:$0xff] %vm139, %v135
    %141 = vst.msk [vmem:[#allocation2 + $0x8] sm:$0xff] %vm139, %v136
    %142 = vst.msk [vmem:[#allocation2 + $0x10] sm:$0xff] %vm139, %v137
    %143 = vst.msk [vmem:[#allocation2 + $0x18] sm:$0xff] %vm139, %v138
    // Predicated region
    $region26: #{tpu_custom_call.1} parent=1 // pred_check
      %p144 = pneg %p44
    $region27: #{tpu_custom_call.1} parent=1 // pred_check_branch
      %146 = sbr.rel (%p144) target = $region29
    $region28: #{tpu_custom_call.1} parent=1 // pred_region
      %v147 = vld [vmem:[#allocation2] sm:$0xff]
      %v148 = vld [vmem:[#allocation2 + $0x8] sm:$0xff]
      %v149 = vld [vmem:[#allocation2 + $0x10] sm:$0xff]
      %v150 = vld [vmem:[#allocation2 + $0x18] sm:$0xff]
      %v151 = vld [vmem:[%s2] sm:$0x1]
      %v153 = vlaneseq
      %v154 = vshrl.u32 %v153, 7
      %v155 = vsub.s32 0, %v154
      %v156 = vrot.slane %v151, %v155
      %v158 = vadd.f32 %v147, %v156
      %v159 = vadd.f32 %v148, %v156
      %v160 = vadd.f32 %v149, %v156
      %v161 = vadd.f32 %v150, %v156
      %v162 = vpack.c.bf16 %v159, %v158
      %v163 = vpack.c.bf16 %v161, %v160
      %v166 = vunpack.c.l.b16 %v162
      %v167 = vunpack.c.h.b16 %v162
      %v168 = vunpack.c.l.b16 %v163
      %v169 = vunpack.c.h.b16 %v163
      %v170 = vpack.c.b16 %v166, %v166
      %v171 = vpack.c.b16 %v167, %v167
      %v172 = vpack.c.b16 %v168, %v168
      %v173 = vpack.c.b16 %v169, %v169
      %vm178 = vcmask 781312
      %179 = vst.msk [vmem:[#allocation8] sm:$0xf] %vm178, %v170
      %180 = vst.msk [vmem:[#allocation8 + $0x4] sm:$0xf] %vm178, %v171
      %181 = vst.msk [vmem:[#allocation8 + $0x8] sm:$0xf] %vm178, %v172
      %182 = vst.msk [vmem:[#allocation8 + $0xc] sm:$0xf] %vm178, %v173
    $region29: #{tpu_custom_call.1} parent=1 // pred_fallthru
      _
    // Predicated region
    $region30: #{tpu_custom_call.1} parent=1 // pred_check
      _
    $region31: #{tpu_custom_call.1} parent=1 // pred_check_branch
      %184 = sbr.rel (0) target = $region33
    $region32: #{tpu_custom_call.1} parent=1 // pred_region
      %s186 = ssub.s32 256, 256
      %187 = vsyncadd [#allocation5], %s186
      %s188 = sshll.u32 [#allocation8], 4
      %s189 = int_to_ptr.vmem [resolvable:$true] %s188
      %194 = dma.vmem_to_hbm [thread:$0]  %s189, 256, %s3, [#allocation5], 64, 64, 4
    $region33: #{tpu_custom_call.1} parent=1 // pred_fallthru
      _
    // Predicated region
    $region34: #{tpu_custom_call.1} parent=1 // pred_check
      _
    $region35: #{tpu_custom_call.1} parent=1 // pred_check_branch
      %196 = sbr.rel (0) target = $region37
    $region36: #{tpu_custom_call.1} parent=1 // pred_region
      %197 = dma.done [#allocation5], 256
    $region37: #{tpu_custom_call.1} parent=1 // pred_fallthru
      _
    %198 = vsyncpa [#allocation4], 1
    %199 = vsyncpa [#allocation7], 1
    %200 = vsyncpa [#allocation5], 1

</llo_original>
